<compile_context>
chip_gen: v5e
topology: v5e:2x2
jax: 0.10.0
libtpu: 0.0.40
codegen_flags: <defaults>
</compile_context>

<pallas_src>
import functools

import jax
import jax.numpy as jnp
from jax.experimental import pallas as pl
from jax.experimental.pallas import tpu as pltpu

EPS = 1e-5


def _round_up(x, m):
    return (x + m - 1) // m * m


def _cdiv(a, b):
    return -(-a // b)


def _vmem_cap_bytes():
    """Per-core VMEM budget: ~78% of physical capacity (headroom for Mosaic
    internal scratch). Falls back to 64 MiB physical (v7x per-TC) if the
    hardware query is unavailable."""
    try:
        phys = int(pltpu.get_tpu_info().vmem_capacity_bytes)
        if phys <= 0:
            raise ValueError
    except Exception:
        phys = 64 * 1024 * 1024
    return int(phys * 0.78)


def _prenorm_kernel(x_ref, w_ref, b_ref, o_ref, normed_ref, *, d_real):
    # x_ref:  (tm, D_pad) row tile (zero-padded beyond d_real columns / M rows)
    # w_ref:  (D_pad, tn) panel of folded weight W' = diag(gamma) @ W (zero-padded)
    # b_ref:  (1, tn)     panel of folded bias  b' = beta @ W + b (f32, zero-padded)
    # normed_ref: (tm, D_pad) VMEM scratch caching the normalized rows.
    #
    # LayerNorm is computed once per row tile (inner column axis j == 0) and
    # cached; each j step is then a pure MXU matmul against one W' panel.
    @pl.when(pl.program_id(1) == 0)
    def _():
        x = x_ref[...].astype(jnp.float32)
        d_pad = x.shape[-1]
        inv_d = jnp.float32(1.0 / d_real)
        # nn.LayerNorm: biased variance, eps inside rsqrt. Padded columns of x
        # are zero, so the row sum already equals the sum over real columns.
        mean = jnp.sum(x, axis=-1, keepdims=True) * inv_d
        xc = x - mean
        sq = jnp.sum(xc * xc, axis=-1, keepdims=True)
        if d_pad != d_real:
            # Padded columns of xc equal exactly -mean -> closed-form fix
            # (no mask / select / extra full-tile temporary needed).
            sq = sq - jnp.float32(d_pad - d_real) * (mean * mean)
        inv = jax.lax.rsqrt(sq * inv_d + EPS)
        # Padded columns of `normed` are annihilated by the zero rows of W'.
        normed_ref[...] = (xc * inv).astype(normed_ref.dtype)

    out = jnp.dot(normed_ref[...], w_ref[...],
                  preferred_element_type=jnp.float32)
    o_ref[...] = (out + b_ref[...]).astype(o_ref.dtype)


def prenorm_forward(x, gamma, beta, w, b, *, tm=None, tn=None,
                    matmul_dtype=None):
    """x: (B, N, D).  Returns fn(LayerNorm(x)) with fn = Linear(D, D), i.e.
    LayerNorm(x; gamma, beta, eps=1e-5) @ w + b.

    matmul_dtype: dtype for the MXU operands (default: w.dtype). Pass
    jnp.bfloat16 for f32 weights on v5e (no native f32 MXU path)."""
    B, N, D = x.shape
    M = B * N
    x_dt = jnp.dtype(x.dtype)
    mm_dt = jnp.dtype(matmul_dtype) if matmul_dtype is not None else jnp.dtype(w.dtype)

    # Fold the LayerNorm affine into the Linear (one-time, wrapper side):
    #   (n*gamma + beta) @ W + b == n @ (gamma[:,None]*W) + (beta @ W + b)
    w32 = w.astype(jnp.float32)
    w_f = (gamma.astype(jnp.float32)[:, None] * w32).astype(mm_dt)
    b_f = beta.astype(jnp.float32) @ w32 + b.astype(jnp.float32)   # stays f32

    # ---- tiling -----------------------------------------------------------
    # Lane-dense output; 256-align large D so v6e/v7x 256-wide MXUs see full
    # K/N panels (128 alignment is already optimal on v5e, and the extra pad
    # there is negligible).
    lane_align = 256 if D >= 1024 else 128
    D_pad = _round_up(D, lane_align)

    cap = _vmem_cap_bytes()
    x_isz = x_dt.itemsize
    w_isz = mm_dt.itemsize

    # Row tile: large (amortize grid-step overhead, feed the MXU), smaller for
    # big D_pad so f32 in-kernel temporaries don't spill, and balanced so the
    # last tile isn't mostly padding (e.g. M=520 no longer costs ~2x).
    if tm is None:
        tm = 256 if D_pad >= 2048 else 512
    n_row = max(1, _cdiv(M, tm))
    tm_eff = _round_up(_cdiv(M, n_row), 8)
    M_pad = _round_up(M, tm_eff)

    def est(tn_c, w_bufs):
        return (2 * tm_eff * D_pad * x_isz          # x tile (double-buffered)
                + 2 * tm_eff * tn_c * x_isz         # out tile (double-buffered)
                + w_bufs * D_pad * tn_c * w_isz     # W' panel(s)
                + w_bufs * tn_c * 4                 # b' panel(s), f32
                + tm_eff * D_pad * w_isz            # normed scratch
                + 3 * tm_eff * D_pad * 4)           # in-kernel f32 temporaries

    # Column tile: keep W' fully resident (single-buffered) if it fits the
    # per-core budget (note: on v7x each TensorCore holds its own copy),
    # otherwise stream lane-aligned column panels of W'.
    if tn is None:
        if est(D_pad, 1) <= cap:
            tn = D_pad
        else:
            tn = 128
            for cand in (2048, 1024, 512, 256, 128):
                if cand <= D_pad and D_pad % cand == 0 and est(cand, 2) <= cap:
                    tn = cand
                    break
    tn = min(tn, D_pad)
    assert D_pad % tn == 0 and tn % 128 == 0
    num_j = D_pad // tn

    # ---- padding ------------------------------------------------------------
    x2 = x.reshape(M, D)
    if M_pad != M or D_pad != D:
        x2 = jnp.pad(x2, ((0, M_pad - M), (0, D_pad - D)))
    if D_pad != D:
        w_f = jnp.pad(w_f, ((0, D_pad - D), (0, D_pad - D)))
        b_f = jnp.pad(b_f, (0, D_pad - D))
    b_f2 = b_f.reshape(1, D_pad)

    # ---- specs --------------------------------------------------------------
    # x row tile stays resident across the inner j axis (constant in j).
    x_spec = pl.BlockSpec((tm_eff, D_pad), lambda i, j: (i, 0))
    if num_j == 1:
        # Constant index_map => second buffer would be pure VMEM waste.
        w_spec = pl.BlockSpec((D_pad, tn), lambda i, j: (0, 0),
                              pipeline_mode=pl.Buffered(1))
        b_spec = pl.BlockSpec((1, tn), lambda i, j: (0, 0),
                              pipeline_mode=pl.Buffered(1))
    else:
        w_spec = pl.BlockSpec((D_pad, tn), lambda i, j: (0, j))
        b_spec = pl.BlockSpec((1, tn), lambda i, j: (0, j))
    out_spec = pl.BlockSpec((tm_eff, tn), lambda i, j: (i, j))

    w_bufs = 1 if num_j == 1 else 2
    vmem_bytes = int(min(cap, max(int(1.25 * est(tn, w_bufs)),
                                  8 * 1024 * 1024)))

    kernel = functools.partial(_prenorm_kernel, d_real=D)

    out = pl.pallas_call(
        kernel,
        out_shape=jax.ShapeDtypeStruct((M_pad, D_pad), x_dt),
        grid_spec=pltpu.PrefetchScalarGridSpec(
            num_scalar_prefetch=0,
            grid=(M_pad // tm_eff, num_j),
            in_specs=[x_spec, w_spec, b_spec],
            out_specs=out_spec,
            scratch_shapes=[pltpu.VMEM((tm_eff, D_pad), mm_dt)],
        ),
        compiler_params=pltpu.CompilerParams(
            dimension_semantics=("parallel", "arbitrary"),
            vmem_limit_bytes=vmem_bytes),
    )(x2, w_f, b_f2)

    return out[:M, :D].reshape(B, N, D)


def _reference(x, gamma, beta, w, b):
    xf = x.astype(jnp.float32)
    mean = jnp.mean(xf, axis=-1, keepdims=True)
    var = jnp.mean((xf - mean) ** 2, axis=-1, keepdims=True)
    normed = (xf - mean) / jnp.sqrt(var + EPS) * gamma.astype(jnp.float32) \
        + beta.astype(jnp.float32)
    out = normed @ w.astype(jnp.float32) + b.astype(jnp.float32)
    return out.astype(x.dtype)


def _run_case(key, B, N, D, dtype, *, tn=None, tol=2e-2):
    k_x, k_g, k_b, k_w, k_lb = jax.random.split(key, 5)
    x = jax.random.normal(k_x, (B, N, D), jnp.float32).astype(dtype)
    gamma = (jnp.ones((D,), jnp.float32)
             + 0.05 * jax.random.normal(k_g, (D,), jnp.float32)).astype(dtype)
    beta = (0.05 * jax.random.normal(k_b, (D,), jnp.float32)).astype(dtype)
    w = (jax.random.normal(k_w, (D, D), jnp.float32) / D ** 0.5).astype(dtype)
    b = (0.05 * jax.random.normal(k_lb, (D,), jnp.float32)).astype(dtype)

    out = jax.block_until_ready(prenorm_forward(x, gamma, beta, w, b, tn=tn))
    ref = _reference(x, gamma, beta, w, b)
    assert out.shape == (B, N, D) and out.dtype == x.dtype
    err = float(jnp.max(jnp.abs(out.astype(jnp.float32)
                                - ref.astype(jnp.float32))))
    # Modest tolerance: MXU matmul precision (multi-pass f32 / bf16 operands)
    # differs slightly from the pure-f32 reference; structural bugs (wrong
    # stats, fold, padding correction) produce errors >> tol.
    assert err <= tol, (B, N, D, str(dtype), err)
    return err


if __name__ == "__main__":
    key = jax.random.PRNGKey(0)
    k1, k2, k3 = jax.random.split(key, 3)

    # Primary small case: D=32 (padded to 128), f32, resident W'.
    _run_case(k1, 2, 8, 32, jnp.float32, tol=2e-2)
    # bf16 activations/weights, D an exact multiple of 128 (bf16 MXU path).
    _run_case(k2, 2, 8, 128, jnp.bfloat16, tol=6e-2)
    # M not a multiple of 8 + forced W' column streaming (num_j > 1 path).
    _run_case(k3, 2, 9, 256, jnp.float32, tn=128, tol=2e-2)

    print("KERNEL_OK")
</pallas_src>

<mosaic_0001>
module attributes {stable_mosaic.version = 11 : i64} {
  func.func @_prenorm_kernel(%arg0: i32, %arg1: i32, %arg2: memref<16x128xf32, #tpu.memory_space<vmem>>, %arg3: memref<128x128xf32, #tpu.memory_space<vmem>>, %arg4: memref<1x128xf32, #tpu.memory_space<vmem>>, %arg5: memref<16x128xf32, #tpu.memory_space<vmem>>, %arg6: memref<16x128xf32, #tpu.memory_space<vmem>>) attributes {dimension_semantics = [#tpu.dimension_semantics<parallel>, #tpu.dimension_semantics<arbitrary>], iteration_bounds = array<i64: 1, 1>, scalar_prefetch = 0 : i64, scratch_operands = 1 : i64, tpu.core_type = #tpu.core_type<tc>, window_params = [{transform_indices = @transform_0, window_bounds = array<i64: 16, 128>}, {pipeline_mode = #tpu.pipeline_mode<synchronous>, transform_indices = @transform_1, window_bounds = array<i64: 128, 128>}, {pipeline_mode = #tpu.pipeline_mode<synchronous>, transform_indices = @transform_2, window_bounds = array<i64: 1, 128>}, {transform_indices = @transform_3, window_bounds = array<i64: 16, 128>}]} {
    %c0_i32 = arith.constant 0 : i32
    %0 = arith.cmpi eq, %arg1, %c0_i32 : i32
    %1 = arith.extui %0 : i1 to i32
    %c0_i32_0 = arith.constant 0 : i32
    %2 = arith.cmpi ne, %1, %c0_i32_0 : i32
    scf.if %2 {
      %c0_8 = arith.constant 0 : index
      %c0_9 = arith.constant 0 : index
      %10 = vector.load %arg2[%c0_8, %c0_9] : memref<16x128xf32, #tpu.memory_space<vmem>>, vector<16x128xf32>
      %cst_10 = arith.constant dense<0.000000e+00> : vector<16xf32>
      %11 = vector.multi_reduction <add>, %10, %cst_10 [1] : vector<16x128xf32> to vector<16xf32>
      %12 = vector.shape_cast %11 : vector<16xf32> to vector<16x1xf32>
      %cst_11 = arith.constant 3.125000e-02 : f32
      %13 = vector.broadcast %cst_11 : f32 to vector<16x1xf32>
      %14 = arith.mulf %12, %13 : vector<16x1xf32>
      %15 = vector.broadcast %14 : vector<16x1xf32> to vector<16x128xf32>
      %16 = arith.subf %10, %15 : vector<16x128xf32>
      %17 = arith.mulf %16, %16 : vector<16x128xf32>
      %cst_12 = arith.constant dense<0.000000e+00> : vector<16xf32>
      %18 = vector.multi_reduction <add>, %17, %cst_12 [1] : vector<16x128xf32> to vector<16xf32>
      %19 = vector.shape_cast %18 : vector<16xf32> to vector<16x1xf32>
      %20 = arith.mulf %14, %14 : vector<16x1xf32>
      %cst_13 = arith.constant 9.600000e+01 : f32
      %21 = vector.broadcast %cst_13 : f32 to vector<16x1xf32>
      %22 = arith.mulf %21, %20 : vector<16x1xf32>
      %23 = arith.subf %19, %22 : vector<16x1xf32>
      %cst_14 = arith.constant 3.125000e-02 : f32
      %24 = vector.broadcast %cst_14 : f32 to vector<16x1xf32>
      %25 = arith.mulf %23, %24 : vector<16x1xf32>
      %cst_15 = arith.constant 9.99999974E-6 : f32
      %26 = vector.broadcast %cst_15 : f32 to vector<16x1xf32>
      %27 = arith.addf %25, %26 : vector<16x1xf32>
      %28 = math.rsqrt %27 : vector<16x1xf32>
      %29 = vector.broadcast %28 : vector<16x1xf32> to vector<16x128xf32>
      %30 = arith.mulf %16, %29 : vector<16x128xf32>
      %c0_16 = arith.constant 0 : index
      %c0_17 = arith.constant 0 : index
      %31 = vector.load %arg6[%c0_16, %c0_17] : memref<16x128xf32, #tpu.memory_space<vmem>>, vector<16x128xf32>
      tpu.vector_store %arg6[%c0_16, %c0_17], %30 {strides = array<i32>} : memref<16x128xf32, #tpu.memory_space<vmem>>, vector<16x128xf32>,
    } else {
    }
    %c0 = arith.constant 0 : index
    %c0_1 = arith.constant 0 : index
    %3 = vector.load %arg6[%c0, %c0_1] : memref<16x128xf32, #tpu.memory_space<vmem>>, vector<16x128xf32>
    %c0_2 = arith.constant 0 : index
    %c0_3 = arith.constant 0 : index
    %4 = vector.load %arg3[%c0_2, %c0_3] : memref<128x128xf32, #tpu.memory_space<vmem>>, vector<128x128xf32>
    %cst = arith.constant dense<0.000000e+00> : vector<16x128xf32>
    %5 = tpu.matmul %3, %4, %cst {dimension_numbers = #tpu.dot_dimension_numbers<[1], [0], [0], [1], [0, 0, 1, 1], [], []>} : vector<16x128xf32>, vector<128x128xf32>, vector<16x128xf32> -> vector<16x128xf32>
    %c0_4 = arith.constant 0 : index
    %c0_5 = arith.constant 0 : index
    %6 = vector.load %arg4[%c0_4, %c0_5] : memref<1x128xf32, #tpu.memory_space<vmem>>, vector<1x128xf32>
    %7 = vector.broadcast %6 : vector<1x128xf32> to vector<16x128xf32>
    %8 = arith.addf %5, %7 : vector<16x128xf32>
    %c0_6 = arith.constant 0 : index
    %c0_7 = arith.constant 0 : index
    %9 = vector.load %arg5[%c0_6, %c0_7] : memref<16x128xf32, #tpu.memory_space<vmem>>, vector<16x128xf32>
    tpu.vector_store %arg5[%c0_6, %c0_7], %8 {strides = array<i32>} : memref<16x128xf32, #tpu.memory_space<vmem>>, vector<16x128xf32>,
    return
  }
  func.func @transform_0(%arg0: i32, %arg1: i32) -> (i32, i32) {
    %c0_i32 = arith.constant 0 : i32
    %c0_i32_0 = arith.constant 0 : i32
    return %arg0, %c0_i32 : i32, i32
  }
  func.func @transform_1(%arg0: i32, %arg1: i32) -> (i32, i32) {
    %c0_i32 = arith.constant 0 : i32
    %c0_i32_0 = arith.constant 0 : i32
    %c0_i32_1 = arith.constant 0 : i32
    return %c0_i32, %c0_i32_0 : i32, i32
  }
  func.func @transform_2(%arg0: i32, %arg1: i32) -> (i32, i32) {
    %c0_i32 = arith.constant 0 : i32
    %c0_i32_0 = arith.constant 0 : i32
    %c0_i32_1 = arith.constant 0 : i32
    return %c0_i32, %c0_i32_0 : i32, i32
  }
  func.func @transform_3(%arg0: i32, %arg1: i32) -> (i32, i32) {
    %c0_i32 = arith.constant 0 : i32
    return %arg0, %arg1 : i32, i32
  }
}

</mosaic_0001>

<llo_original>
// kernel: tpu_custom_call.1
$region0: #{tpu_custom_call.1}
  #allocation0 [shape = 'u32[]', space=smem, size = 0x4, offset = 0x4, fixed_abs, tag = 'smem constant byte address 0x4 - core index']
  #allocation1 [shape = 'u32[72,128]{1,0:T(1,128)}', space=vmem, size = 0x9000, scoped, tag = 'internal scratch']
  #allocation2 [shape = 'f32[16,128]{1,0:T(8,128)}', space=vmem, size = 0x2000, scoped, tag = 'scratch operand']
  %s0 = inlined_call_operand.hbm [shape: f32[16,128], index: 0, kind: input, shape index: {}]
  %s1 = inlined_call_operand.hbm [shape: f32[128,128], index: 1, kind: input, shape index: {}]
  %s2 = inlined_call_operand.vmem [shape: f32[1,128], index: 2, kind: input, shape index: {}]
  %s3 = inlined_call_operand.hbm [shape: f32[16,128], index: 3, kind: output, shape index: {}]
  %s4 = sld [smem:[#allocation0]]
  $region34: #{tpu_custom_call.1} parent=0
    _
  %s6 = ssub.s32 1, %s4
  %s7 = scalar_select 0, %s6, %s4
  $region1: #{tpu_custom_call.1} parent=0
    #allocation3 [shape = 'u8[8192]{0}', space=vmem, size = 0x2000, scoped, tag = 'input window, operand 0, single buffered']
    #allocation4 [shape = 's32[1]{0}', space=sflag, size = 0x4, scoped, tag = 'scoped memory for tpu_custom_call.1']
    #allocation5 [shape = 's32[1]{0}', space=sflag, size = 0x4, scoped, tag = 'scoped memory for tpu_custom_call.1']
    #allocation6 [shape = 'u8[65536]{0}', space=vmem, size = 0x10000, scoped, tag = 'input window, operand 1, single buffered']
    #allocation7 [shape = 's32[1]{0}', space=sflag, size = 0x4, scoped, tag = 'scoped memory for tpu_custom_call.1']
    #allocation8 [shape = 'u8[8192]{0}', space=vmem, size = 0x2000, scoped, tag = 'output window, operand 0, single buffered']
    %8 = vsyncpa [#allocation4], 0
    %9 = vsyncpa [#allocation7], 0
    %10 = vsyncpa [#allocation5], 0
    // Predicated region
    $region2: #{tpu_custom_call.1} parent=1 // pred_check
      _
    $region3: #{tpu_custom_call.1} parent=1 // pred_check_branch
      %12 = sbr.rel (0) target = $region5
    $region4: #{tpu_custom_call.1} parent=1 // pred_region
      %14 = vsyncadd [#allocation4], 0
      %s15 = sshll.u32 %s0, 4
      %s16 = int_to_ptr.hbm [resolvable:$true] %s15
      %s17 = sshll.u32 [#allocation3], 4
      %s18 = int_to_ptr.vmem [resolvable:$true] %s17
      %23 = dma.hbm_to_vmem [thread:$0]  %s16, 256, %s18, [#allocation4], 128, 128, 8
    $region5: #{tpu_custom_call.1} parent=1 // pred_fallthru
      _
    // Predicated region
    $region6: #{tpu_custom_call.1} parent=1 // pred_check
      _
    $region7: #{tpu_custom_call.1} parent=1 // pred_check_branch
      %25 = sbr.rel (0) target = $region9
    $region8: #{tpu_custom_call.1} parent=1 // pred_region
      %27 = vsyncadd [#allocation7], 0
      %s28 = sshll.u32 %s1, 4
      %s29 = int_to_ptr.hbm [resolvable:$true] %s28
      %s30 = sshll.u32 [#allocation6], 4
      %s31 = int_to_ptr.vmem [resolvable:$true] %s30
      %36 = dma.hbm_to_vmem [thread:$0]  %s29, 2048, %s31, [#allocation7], 128, 128, 8
    $region9: #{tpu_custom_call.1} parent=1 // pred_fallthru
      _
    // Predicated region
    $region10: #{tpu_custom_call.1} parent=1 // pred_check
      _
    $region11: #{tpu_custom_call.1} parent=1 // pred_check_branch
      %38 = sbr.rel (0) target = $region13
    $region12: #{tpu_custom_call.1} parent=1 // pred_region
      _
    $region13: #{tpu_custom_call.1} parent=1 // pred_fallthru
      _
    // Predicated region
    $region14: #{tpu_custom_call.1} parent=1 // pred_check
      _
    $region15: #{tpu_custom_call.1} parent=1 // pred_check_branch
      %40 = sbr.rel (0) target = $region17
    $region16: #{tpu_custom_call.1} parent=1 // pred_region
      %42 = dma.done [#allocation4], 256
    $region17: #{tpu_custom_call.1} parent=1 // pred_fallthru
      _
    // Predicated region
    $region18: #{tpu_custom_call.1} parent=1 // pred_check
      _
    $region19: #{tpu_custom_call.1} parent=1 // pred_check_branch
      %44 = sbr.rel (0) target = $region21
    $region20: #{tpu_custom_call.1} parent=1 // pred_region
      %46 = dma.done [#allocation7], 2048
    $region21: #{tpu_custom_call.1} parent=1 // pred_fallthru
      _
    %p47 = scmp.eq.s32.totalorder 0, 0
    // Predicated region
    $region22: #{tpu_custom_call.1} parent=1 // pred_check
      %p48 = pneg %p47
    $region23: #{tpu_custom_call.1} parent=1 // pred_check_branch
      %50 = sbr.rel (%p48) target = $region25
    $region24: #{tpu_custom_call.1} parent=1 // pred_region
      %v51 = vld [vmem:[#allocation3] sm:$0xff]
      %v52 = vld [vmem:[#allocation3 + $0x8] sm:$0xff]
      %53 = vadd.xlane.f32.xlu0 %v51
      %v54 = vpop.xlane.xlu0 %53
      %55 = vadd.xlane.f32.xlu0 %v52
      %v56 = vpop.xlane.xlu0 %55
      %v57 = vmul.f32 %v54, 0.03125
      %v58 = vmul.f32 %v56, 0.03125
      %v59 = vsub.f32 %v51, %v57
      %v60 = vsub.f32 %v52, %v58
      %v61 = vmul.f32 %v59, %v59
      %v62 = vmul.f32 %v60, %v60
      %63 = vadd.xlane.f32.xlu0 %v61
      %v64 = vpop.xlane.xlu0 %63
      %65 = vadd.xlane.f32.xlu0 %v62
      %v66 = vpop.xlane.xlu0 %65
      %v67 = vmul.f32 %v57, %v57
      %v68 = vmul.f32 %v58, %v58
      %v69 = vmul.f32 %v67, 96.0
      %v70 = vmul.f32 %v68, 96.0
      %v71 = vsub.f32 %v64, %v69
      %v72 = vsub.f32 %v66, %v70
      %v73 = vmul.f32 %v71, 0.03125
      %v74 = vmul.f32 %v72, 0.03125
      %v75 = vadd.f32 %v73, 1e-05
      %v76 = vadd.f32 %v74, 1e-05
      %v77 = vrsqrt.pop %v75
      %v78 = vmul.f32 %v77, %v75
      %v79 = vmul.f32 %v78, %v77
      %v80 = vmul.f32 0.5, %v79
      %v81 = vsub.f32 1.5, %v80
      %v82 = vmul.f32 %v77, %v81
      %vm83 = vweird.f32 %v75
      %vm84 = vweird.f32 %v77
      %vm85 = vmor %vm83, %vm84
      %v86 = vsel %vm85, %v77, %v82
      %v87 = vrsqrt.pop %v76
      %v88 = vmul.f32 %v87, %v76
      %v89 = vmul.f32 %v88, %v87
      %v90 = vmul.f32 0.5, %v89
      %v91 = vsub.f32 1.5, %v90
      %v92 = vmul.f32 %v87, %v91
      %vm93 = vweird.f32 %v76
      %vm94 = vweird.f32 %v87
      %vm95 = vmor %vm93, %vm94
      %v96 = vsel %vm95, %v87, %v92
      %v97 = vmul.f32 %v59, %v86
      %v98 = vmul.f32 %v60, %v96
      %99 = vst [vmem:[#allocation2] sm:$0xff] %v97
      %100 = vst [vmem:[#allocation2 + $0x8] sm:$0xff] %v98
    $region25: #{tpu_custom_call.1} parent=1 // pred_fallthru
      _
    %v101 = vld [vmem:[#allocation2] sm:$0xff]
    %v102 = vld [vmem:[#allocation2 + $0x8] sm:$0xff]
    %v103 = vld [vmem:[#allocation6] sm:$0xff]
    %v104 = vld [vmem:[#allocation6 + $0x8] sm:$0xff]
    %v105 = vld [vmem:[#allocation6 + $0x10] sm:$0xff]
    %v106 = vld [vmem:[#allocation6 + $0x18] sm:$0xff]
    %v107 = vld [vmem:[#allocation6 + $0x20] sm:$0xff]
    %v108 = vld [vmem:[#allocation6 + $0x28] sm:$0xff]
    %v109 = vld [vmem:[#allocation6 + $0x30] sm:$0xff]
    %v110 = vld [vmem:[#allocation6 + $0x38] sm:$0xff]
    %v111 = vld [vmem:[#allocation6 + $0x40] sm:$0xff]
    %v112 = vld [vmem:[#allocation6 + $0x48] sm:$0xff]
    %v113 = vld [vmem:[#allocation6 + $0x50] sm:$0xff]
    %v114 = vld [vmem:[#allocation6 + $0x58] sm:$0xff]
    %v115 = vld [vmem:[#allocation6 + $0x60] sm:$0xff]
    %v116 = vld [vmem:[#allocation6 + $0x68] sm:$0xff]
    %v117 = vld [vmem:[#allocation6 + $0x70] sm:$0xff]
    %v118 = vld [vmem:[#allocation6 + $0x78] sm:$0xff]
    %v119 = vld [vmem:[%s2] sm:$0x1]
    %v121 = vperm.slane %v119, 0
    %123 = vmatpush.msra.mxu0 %v118
    %124 = vmatpush.msra.mxu0 %v117
    %125 = vmatpush.msra.mxu0 %v116
    %126 = vmatpush.msra.mxu0 %v115
    %127 = vmatpush.msra.mxu0 %v114
    %128 = vmatpush.msra.mxu0 %v113
    %129 = vmatpush.msra.mxu0 %v112
    %130 = vmatpush.msra.mxu0 %v111
    %131 = vmatpush.msra.mxu0 %v110
    %132 = vmatpush.msra.mxu0 %v109
    %133 = vmatpush.msra.mxu0 %v108
    %134 = vmatpush.msra.mxu0 %v107
    %135 = vmatpush.msra.mxu0 %v106
    %136 = vmatpush.msra.mxu0 %v105
    %137 = vmatpush.msra.mxu0 %v104
    %138 = vmatpush.msra.mxu0 %v103
    %139 = vmatmul.f32.gmra.mxu0 %v101
    %v140 = vpop.f32.mrf.mxu0
    %v141 = vadd.f32 %v121, %v140
    %142 = vmatmul.f32.gmra.mxu0 %v102
    %v143 = vpop.f32.mrf.mxu0
    %v144 = vadd.f32 %v121, %v143
    %145 = vdwg.mxu0
    %146 = vst [vmem:[#allocation8] sm:$0xff] %v141
    %147 = vst [vmem:[#allocation8 + $0x8] sm:$0xff] %v144
    // Predicated region
    $region26: #{tpu_custom_call.1} parent=1 // pred_check
      _
    $region27: #{tpu_custom_call.1} parent=1 // pred_check_branch
      %149 = sbr.rel (0) target = $region29
    $region28: #{tpu_custom_call.1} parent=1 // pred_region
      %151 = vsyncadd [#allocation5], 0
      %s152 = sshll.u32 [#allocation8], 4
      %s153 = int_to_ptr.vmem [resolvable:$true] %s152
      %s154 = sshll.u32 %s3, 4
      %s155 = int_to_ptr.hbm [resolvable:$true] %s154
      %160 = dma.vmem_to_hbm [thread:$0]  %s153, 256, %s155, [#allocation5], 128, 128, 8
    $region29: #{tpu_custom_call.1} parent=1 // pred_fallthru
      _
    // Predicated region
    $region30: #{tpu_custom_call.1} parent=1 // pred_check
      _
    $region31: #{tpu_custom_call.1} parent=1 // pred_check_branch
      %162 = sbr.rel (0) target = $region33
    $region32: #{tpu_custom_call.1} parent=1 // pred_region
      %164 = dma.done [#allocation5], 256
    $region33: #{tpu_custom_call.1} parent=1 // pred_fallthru
      _
    %165 = vsyncpa [#allocation4], 1
    %166 = vsyncpa [#allocation7], 1
    %167 = vsyncpa [#allocation5], 1

</llo_original>
